<compile_context>
chip_gen: v7x
topology: tpu7x:2x2x1
jax: 0.10.0
libtpu: 0.0.40
codegen_flags: <defaults>
</compile_context>

<pallas_src>
import functools

import jax
import jax.numpy as jnp
from jax import lax
from jax.experimental import pallas as pl
from jax.experimental.pallas import tpu as pltpu


_LN_EPS = 1e-5  # TODO(synk): 1e-6 if the checkpoint used eps=1e-6 LayerNorms.


def _layer_norm(x, w, b):
    # x: (rows, E) fp32 ; w, b: (1, E) fp32
    mu = jnp.mean(x, axis=-1, keepdims=True)
    d = x - mu
    var = jnp.mean(d * d, axis=-1, keepdims=True)
    return d * lax.rsqrt(var + _LN_EPS) * w + b


def _erf(x):
    # Abramowitz-Stegun 7.1.26 rational approximation (exp + reciprocal -> EUP slot).
    a1, a2, a3, a4, a5 = (0.254829592, -0.284496736, 1.421413741,
                          -1.453152027, 1.061405429)
    p = 0.3275911
    s = jnp.where(x >= 0.0, 1.0, -1.0)
    ax = jnp.abs(x)
    t = pl.reciprocal(1.0 + p * ax, approx=True)          # EUP, frees VALU
    poly = t * (a1 + t * (a2 + t * (a3 + t * (a4 + t * a5))))
    return s * (1.0 - poly * jnp.exp(-ax * ax))


def _gelu(x):  # exact GELU: 0.5*x*(1+erf(x/sqrt(2)))
    return 0.5 * x * (1.0 + _erf(x * 0.7071067811865476))


# --------------------------------------------------------------------------- #
# Stage 1: patchify + positional embedding + CLS token -> padded token slab.
# --------------------------------------------------------------------------- #
def patch_embed_kernel(xp_ref, wp_ref, bp_ref, pos_ref, cls_ref, tok_ref):
    BB, T, CP = xp_ref.shape
    _, N_pad, E = tok_ref.shape
    xp = xp_ref[...].reshape(BB * T, CP)                       # bf16
    patches = jnp.dot(xp, wp_ref[...],
                      preferred_element_type=jnp.float32) + bp_ref[...]
    patches = patches.reshape(BB, T, E) + pos_ref[...][None]
    cls_b = jnp.broadcast_to(cls_ref[...][None], (BB, 1, E))
    pieces = [cls_b, patches]
    pad_rows = N_pad - 1 - T
    if pad_rows > 0:
        pieces.append(jnp.zeros((BB, pad_rows, E), jnp.float32))
    tok_ref[...] = jnp.concatenate(pieces, axis=1)


# --------------------------------------------------------------------------- #
# Stage 2: layer-streamed transformer blocks + final LN + masked mean pooling.
# --------------------------------------------------------------------------- #
def vit_layers_kernel(tok0_ref,
                      ln1w_ref, ln1b_ref,
                      qw_ref, qb_ref, kw_ref, kb_ref, vw_ref, vb_ref,
                      projw_ref, projb_ref,
                      ln2w_ref, ln2b_ref,
                      fc1w_ref, fc1b_ref, fc2w_ref, fc2b_ref,
                      lnfw_ref, lnfb_ref,
                      out_ref, tok_ref,
                      *, num_heads, n_tokens):
    BB, N_pad, E = tok_ref.shape
    hd = E // num_heads
    scale = float(hd) ** -0.5
    rows = BB * N_pad
    l = pl.program_id(1)
    L = pl.num_programs(1)

    # First layer iteration for this batch block: load the initial token slab.
    @pl.when(l == 0)
    def _init():
        tok_ref[...] = tok0_ref[...]

    # Additive bias masking padded key columns (hoisted out of the head loop).
    col = lax.broadcasted_iota(jnp.int32, (1, 1, N_pad), 2)
    key_bias = jnp.where(col < n_tokens, 0.0, -1e30).astype(jnp.float32)

    # ------------------------------- MHSA ---------------------------------- #
    x = tok_ref[...].reshape(rows, E)                           # fp32 residual
    h = _layer_norm(x, ln1w_ref[0], ln1b_ref[0]).astype(jnp.bfloat16)

    # qkv: bias-add + bf16 cast fused right after each matmul so no fp32
    # (rows, E) slabs stay live simultaneously.
    q3 = (jnp.dot(h, qw_ref[0], preferred_element_type=jnp.float32)
          + qb_ref[0]).astype(jnp.bfloat16).reshape(BB, N_pad, E)
    k3 = (jnp.dot(h, kw_ref[0], preferred_element_type=jnp.float32)
          + kb_ref[0]).astype(jnp.bfloat16).reshape(BB, N_pad, E)
    v3 = (jnp.dot(h, vw_ref[0], preferred_element_type=jnp.float32)
          + vb_ref[0]).astype(jnp.bfloat16).reshape(BB, N_pad, E)

    # TODO(synk): head-batched einsum ('bqhd,bkhd->bhqk') once Mosaic supports the
    # required lane-splitting reshape / multi-batch-dim dot_general.
    head_outs = []
    for hh in range(num_heads):                                 # static lane slices
        sl = slice(hh * hd, (hh + 1) * hd)
        sc = jnp.einsum('bqd,bkd->bqk', q3[:, :, sl], k3[:, :, sl],
                        preferred_element_type=jnp.float32) * scale + key_bias
        m = jnp.max(sc, axis=-1, keepdims=True)
        p = jnp.exp(sc - m)
        p = p * pl.reciprocal(jnp.sum(p, axis=-1, keepdims=True), approx=True)
        head_outs.append(jnp.einsum('bqk,bkd->bqd', p.astype(jnp.bfloat16),
                                    v3[:, :, sl],
                                    preferred_element_type=jnp.float32))
    o = jnp.concatenate(head_outs, axis=-1).reshape(rows, E).astype(jnp.bfloat16)
    attn = jnp.dot(o, projw_ref[0],
                   preferred_element_type=jnp.float32) + projb_ref[0]
    tok_ref[...] = (x + attn).reshape(BB, N_pad, E)

    # ----------------- MLP, chunked over batch elements -------------------- #
    # Bounds the (chunk, 4E) fp32 GELU intermediate to one batch element
    # (~N_pad rows) instead of the whole (BB*N_pad, 4E) slab.
    @pl.loop(0, BB)
    def _mlp(b):
        xb = tok_ref[b]                                         # (N_pad, E) fp32
        h2 = _layer_norm(xb, ln2w_ref[0], ln2b_ref[0]).astype(jnp.bfloat16)
        m1 = jnp.dot(h2, fc1w_ref[0],
                     preferred_element_type=jnp.float32) + fc1b_ref[0]
        m1 = _gelu(m1).astype(jnp.bfloat16)
        m2 = jnp.dot(m1, fc2w_ref[0],
                     preferred_element_type=jnp.float32) + fc2b_ref[0]
        tok_ref[b] = xb + m2

    # -------------- final LayerNorm + masked mean over real tokens --------- #
    @pl.when(l == L - 1)
    def _final():
        feats = _layer_norm(tok_ref[...].reshape(rows, E),
                            lnfw_ref[...], lnfb_ref[...]).reshape(BB, N_pad, E)
        row = lax.broadcasted_iota(jnp.int32, (1, N_pad, 1), 1)
        mask = (row < n_tokens).astype(jnp.float32)
        out_ref[...] = jnp.sum(feats * mask, axis=1) * (1.0 / float(n_tokens))


# --------------------------------------------------------------------------- #
# Host-side wrapper.
# --------------------------------------------------------------------------- #
def _pick_vmem_limit():
    """Per-generation VMEM budget: ~85% of capacity, 8 MiB headroom.
    v7x (64 MiB) -> ~54 MiB, v5e/v6e (128 MiB) -> ~108 MiB."""
    try:
        cap = int(pltpu.get_tpu_info().vmem_capacity_bytes)
    except Exception:
        cap = 0
    if cap <= 0:
        return 48 * 1024 * 1024          # conservative fallback (fits v7x)
    return int(min(cap * 0.85, cap - 8 * 1024 * 1024))


def _pick_batch_block(B, N_pad, E, hidden, vmem_limit):
    """Largest multiple-of-8 divisor of B such that B//BB >= 2 (both v7x TCs get
    work) and the activations fit next to one double-buffered layer of weights."""
    if B < 16 or B % 8:
        return B
    w_bytes = 2 * 2 * (4 * E * E + 2 * E * hidden)      # bf16 layer, double-buffered
    act_budget = max(vmem_limit - w_bytes - (8 << 20), vmem_limit // 8)
    per_b = N_pad * E * 4 * 8 + 2 * N_pad * N_pad * 4   # slabs + scores (rough)
    cap = max(8, act_budget // per_b)
    bb = 8                                              # 8 always divides B here
    for cand in range(8, B // 2 + 1, 8):
        if B % cand == 0 and cand <= cap:
            bb = cand
    return bb


def vit_classifier_forward(x, params, *, patch_size, num_heads, batch_block=None):
    """x: (B, C, L) float32 (NCL layout, like PyTorch Conv1d input)."""
    B, C, Lseq = x.shape
    T = Lseq // patch_size
    CP = C * patch_size
    E = params["w_patch"].shape[1]
    L = params["q_w"].shape[0]
    Hd = params["fc1_w"].shape[2]
    assert E % num_heads == 0
    N = T + 1
    N_pad = ((N + 7) // 8) * 8

    vmem_limit = _pick_vmem_limit()
    BB = (batch_block if batch_block is not None
          else _pick_batch_block(B, N_pad, E, Hd, vmem_limit))
    assert B % BB == 0 and (BB == B or BB % 8 == 0)

    # glue: extract non-overlapping patches, flatten (c, k) like Conv1d weights
    xp = (x.reshape(B, C, T, patch_size)
            .transpose(0, 2, 1, 3)
            .reshape(B, T, CP)).astype(jnp.bfloat16)

    bf = lambda a: a.astype(jnp.bfloat16)
    f32 = lambda a: a.astype(jnp.float32)

    # ---------------- stage 1: patch embed -> padded token slab ------------- #
    tok0 = pl.pallas_call(
        patch_embed_kernel,
        out_shape=jax.ShapeDtypeStruct((B, N_pad, E), jnp.float32),
        grid=(B // BB,),
        in_specs=[
            pl.BlockSpec((BB, T, CP), lambda bi: (bi, 0, 0)),
            pl.BlockSpec((CP, E), lambda bi: (0, 0)),
            pl.BlockSpec((1, E), lambda bi: (0, 0)),
            pl.BlockSpec((T, E), lambda bi: (0, 0)),
            pl.BlockSpec((1, E), lambda bi: (0, 0)),
        ],
        out_specs=pl.BlockSpec((BB, N_pad, E), lambda bi: (bi, 0, 0)),
        compiler_params=pltpu.CompilerParams(
            dimension_semantics=("parallel",),
            vmem_limit_bytes=vmem_limit),
    )(xp, bf(params["w_patch"]), f32(params["b_patch"]),
      f32(params["pos"]), f32(params["cls"]))

    # ---------------- stage 2: layer-streamed transformer ------------------- #
    def const2(shape):
        return pl.BlockSpec(shape, lambda bi, l: (0,) * len(shape))

    def per_layer(shape):
        return pl.BlockSpec(shape, lambda bi, l: (l,) + (0,) * (len(shape) - 1))

    in_specs = [
        pl.BlockSpec((BB, N_pad, E), lambda bi, l: (bi, 0, 0)),   # tok0
        per_layer((1, 1, E)), per_layer((1, 1, E)),               # ln1 w, b
        per_layer((1, E, E)), per_layer((1, 1, E)),               # q w, b
        per_layer((1, E, E)), per_layer((1, 1, E)),               # k w, b
        per_layer((1, E, E)), per_layer((1, 1, E)),               # v w, b
        per_layer((1, E, E)), per_layer((1, 1, E)),               # proj w, b
        per_layer((1, 1, E)), per_layer((1, 1, E)),               # ln2 w, b
        per_layer((1, E, Hd)), per_layer((1, 1, Hd)),             # fc1 w, b
        per_layer((1, Hd, E)), per_layer((1, 1, E)),              # fc2 w, b
        const2((1, E)), const2((1, E)),                           # final LN w, b
    ]

    args = (tok0,
            f32(params["ln1_w"]), f32(params["ln1_b"]),
            bf(params["q_w"]), f32(params["q_b"]),
            bf(params["k_w"]), f32(params["k_b"]),
            bf(params["v_w"]), f32(params["v_b"]),
            bf(params["proj_w"]), f32(params["proj_b"]),
            f32(params["ln2_w"]), f32(params["ln2_b"]),
            bf(params["fc1_w"]), f32(params["fc1_b"]),
            bf(params["fc2_w"]), f32(params["fc2_b"]),
            f32(params["lnf_w"]), f32(params["lnf_b"]))

    # Advisory cost estimate (matmul + attention flops, GELU/softmax exps, weight DMA).
    hd = E // num_heads
    flops = int(L * (2 * B * N_pad * E * (4 * E + 2 * Hd)
                     + 4 * B * num_heads * N_pad * N_pad * hd))
    transcendentals = int(L * (B * N_pad * Hd + B * num_heads * N_pad * N_pad))
    bytes_accessed = int((B // BB) * L * 2 * (4 * E * E + 2 * E * Hd)
                         + 3 * B * N_pad * E * 4)

    kernel = functools.partial(vit_layers_kernel, num_heads=num_heads, n_tokens=N)
    return pl.pallas_call(
        kernel,
        out_shape=jax.ShapeDtypeStruct((B, E), jnp.float32),
        grid=(B // BB, L),
        in_specs=in_specs,
        out_specs=pl.BlockSpec((BB, E), lambda bi, l: (bi, 0)),
        scratch_shapes=[pltpu.VMEM((BB, N_pad, E), jnp.float32)],
        compiler_params=pltpu.CompilerParams(
            dimension_semantics=("parallel", "arbitrary"),
            vmem_limit_bytes=vmem_limit),
        cost_estimate=pl.CostEstimate(flops=flops,
                                      transcendentals=transcendentals,
                                      bytes_accessed=bytes_accessed),
    )(*args)


def init_params(key, *, n_channel, patch_size, emb_dim, num_layer, sequ_len):
    T = sequ_len // patch_size
    CP = n_channel * patch_size
    hidden = 4 * emb_dim
    ks = jax.random.split(key, 8)

    def nrm(k, shape, std=0.02):
        return (std * jax.random.normal(k, shape)).astype(jnp.float32)

    params = dict(
        # Conv1d(n_channel, emb_dim, patch_size, patch_size) stored as (C*patch, emb)
        # so patchify is a single matmul.
        w_patch=nrm(ks[0], (CP, emb_dim)),
        b_patch=jnp.zeros((1, emb_dim), jnp.float32),
        pos=nrm(ks[1], (T, emb_dim)),        # (T, 1, E) in torch; broadcast over B
        cls=nrm(ks[2], (1, emb_dim)),
        ln1_w=jnp.ones((num_layer, 1, emb_dim), jnp.float32),
        ln1_b=jnp.zeros((num_layer, 1, emb_dim), jnp.float32),
        q_w=nrm(ks[3], (num_layer, emb_dim, emb_dim)),
        q_b=jnp.zeros((num_layer, 1, emb_dim), jnp.float32),
        k_w=nrm(ks[4], (num_layer, emb_dim, emb_dim)),
        k_b=jnp.zeros((num_layer, 1, emb_dim), jnp.float32),
        v_w=nrm(ks[5], (num_layer, emb_dim, emb_dim)),
        v_b=jnp.zeros((num_layer, 1, emb_dim), jnp.float32),
        proj_w=nrm(ks[6], (num_layer, emb_dim, emb_dim)),
        proj_b=jnp.zeros((num_layer, 1, emb_dim), jnp.float32),
        ln2_w=jnp.ones((num_layer, 1, emb_dim), jnp.float32),
        ln2_b=jnp.zeros((num_layer, 1, emb_dim), jnp.float32),
        fc1_w=nrm(ks[7], (num_layer, emb_dim, hidden)),
        fc1_b=jnp.zeros((num_layer, 1, hidden), jnp.float32),
        fc2_w=nrm(jax.random.fold_in(ks[7], 1), (num_layer, hidden, emb_dim)),
        fc2_b=jnp.zeros((num_layer, 1, emb_dim), jnp.float32),
        lnf_w=jnp.ones((1, emb_dim), jnp.float32),
        lnf_b=jnp.zeros((1, emb_dim), jnp.float32),
    )
    # self.head = Linear(emb_dim, num_classes) is defined in __init__ but never
    # used in ViT_Classifier.forward, so it is intentionally omitted.
    return params


if __name__ == "__main__":
    # small shapes consistent with the module: Conv1d input (B, n_channel, sequ_len)
    B, C, Lseq = 2, 4, 16
    patch_size = 2
    emb_dim = 32
    num_layer = 2
    num_heads = 4

    key = jax.random.PRNGKey(0)
    kx, kp = jax.random.split(key)
    x = jax.random.normal(kx, (B, C, Lseq), dtype=jnp.float32)
    params = init_params(kp, n_channel=C, patch_size=patch_size,
                         emb_dim=emb_dim, num_layer=num_layer, sequ_len=Lseq)

    out = vit_classifier_forward(x, params, patch_size=patch_size,
                                 num_heads=num_heads)
    out = jax.block_until_ready(out)
    assert out.shape == (B, emb_dim), out.shape
    assert bool(jnp.all(jnp.isfinite(out)))
    print("KERNEL_OK")
</pallas_src>

<mosaic_0001>
module attributes {stable_mosaic.version = 11 : i64} {
  func.func @patch_embed_kernel(%arg0: i32, %arg1: memref<2x8x8xbf16, #tpu.memory_space<vmem>>, %arg2: memref<8x32xbf16, #tpu.memory_space<vmem>>, %arg3: memref<1x32xf32, #tpu.memory_space<vmem>>, %arg4: memref<8x32xf32, #tpu.memory_space<vmem>>, %arg5: memref<1x32xf32, #tpu.memory_space<vmem>>, %arg6: memref<2x16x32xf32, #tpu.memory_space<vmem>>) attributes {dimension_semantics = [#tpu.dimension_semantics<parallel>], iteration_bounds = array<i64: 1>, scalar_prefetch = 0 : i64, scratch_operands = 0 : i64, tpu.core_type = #tpu.core_type<tc>, window_params = [{transform_indices = @transform_0, window_bounds = array<i64: 2, 8, 8>}, {pipeline_mode = #tpu.pipeline_mode<synchronous>, transform_indices = @transform_1, window_bounds = array<i64: 8, 32>}, {pipeline_mode = #tpu.pipeline_mode<synchronous>, transform_indices = @transform_2, window_bounds = array<i64: 1, 32>}, {pipeline_mode = #tpu.pipeline_mode<synchronous>, transform_indices = @transform_3, window_bounds = array<i64: 8, 32>}, {pipeline_mode = #tpu.pipeline_mode<synchronous>, transform_indices = @transform_4, window_bounds = array<i64: 1, 32>}, {transform_indices = @transform_5, window_bounds = array<i64: 2, 16, 32>}]} {
    %c0 = arith.constant 0 : index
    %c0_0 = arith.constant 0 : index
    %c0_1 = arith.constant 0 : index
    %0 = vector.load %arg1[%c0, %c0_0, %c0_1] : memref<2x8x8xbf16, #tpu.memory_space<vmem>>, vector<2x8x8xbf16>
    %1 = vector.shape_cast %0 : vector<2x8x8xbf16> to vector<16x8xbf16>
    %c0_2 = arith.constant 0 : index
    %c0_3 = arith.constant 0 : index
    %2 = vector.load %arg2[%c0_2, %c0_3] : memref<8x32xbf16, #tpu.memory_space<vmem>>, vector<8x32xbf16>
    %cst = arith.constant dense<0.000000e+00> : vector<16x32xf32>
    %3 = tpu.matmul %1, %2, %cst {dimension_numbers = #tpu.dot_dimension_numbers<[1], [0], [0], [1], [0, 0, 1, 1], [], []>} : vector<16x8xbf16>, vector<8x32xbf16>, vector<16x32xf32> -> vector<16x32xf32>
    %c0_4 = arith.constant 0 : index
    %c0_5 = arith.constant 0 : index
    %4 = vector.load %arg3[%c0_4, %c0_5] : memref<1x32xf32, #tpu.memory_space<vmem>>, vector<1x32xf32>
    %5 = vector.broadcast %4 : vector<1x32xf32> to vector<16x32xf32>
    %6 = arith.addf %3, %5 : vector<16x32xf32>
    %7 = vector.shape_cast %6 : vector<16x32xf32> to vector<2x8x32xf32>
    %c0_6 = arith.constant 0 : index
    %c0_7 = arith.constant 0 : index
    %8 = vector.load %arg4[%c0_6, %c0_7] : memref<8x32xf32, #tpu.memory_space<vmem>>, vector<8x32xf32>
    %9 = vector.shape_cast %8 : vector<8x32xf32> to vector<1x8x32xf32>
    %10 = vector.broadcast %9 : vector<1x8x32xf32> to vector<2x8x32xf32>
    %11 = arith.addf %7, %10 : vector<2x8x32xf32>
    %c0_8 = arith.constant 0 : index
    %c0_9 = arith.constant 0 : index
    %12 = vector.load %arg5[%c0_8, %c0_9] : memref<1x32xf32, #tpu.memory_space<vmem>>, vector<1x32xf32>
    %13 = vector.shape_cast %12 : vector<1x32xf32> to vector<1x1x32xf32>
    %14 = vector.shape_cast %13 : vector<1x1x32xf32> to vector<1x1x32xf32>
    %15 = vector.broadcast %14 : vector<1x1x32xf32> to vector<2x1x32xf32>
    %cst_10 = arith.constant 0.000000e+00 : f32
    %16 = vector.broadcast %cst_10 : f32 to vector<2x7x32xf32>
    %17 = tpu.concatenate %15, %11, %16 in 1 : vector<2x1x32xf32>, vector<2x8x32xf32>, vector<2x7x32xf32> -> vector<2x16x32xf32>
    %c0_11 = arith.constant 0 : index
    %c0_12 = arith.constant 0 : index
    %c0_13 = arith.constant 0 : index
    %18 = vector.load %arg6[%c0_11, %c0_12, %c0_13] : memref<2x16x32xf32, #tpu.memory_space<vmem>>, vector<2x16x32xf32>
    tpu.vector_store %arg6[%c0_11, %c0_12, %c0_13], %17 {strides = array<i32>} : memref<2x16x32xf32, #tpu.memory_space<vmem>>, vector<2x16x32xf32>,
    return
  }
  func.func @transform_0(%arg0: i32) -> (i32, i32, i32) {
    %c0_i32 = arith.constant 0 : i32
    %c0_i32_0 = arith.constant 0 : i32
    %c0_i32_1 = arith.constant 0 : i32
    return %arg0, %c0_i32, %c0_i32_0 : i32, i32, i32
  }
  func.func @transform_1(%arg0: i32) -> (i32, i32) {
    %c0_i32 = arith.constant 0 : i32
    %c0_i32_0 = arith.constant 0 : i32
    %c0_i32_1 = arith.constant 0 : i32
    return %c0_i32, %c0_i32_0 : i32, i32
  }
  func.func @transform_2(%arg0: i32) -> (i32, i32) {
    %c0_i32 = arith.constant 0 : i32
    %c0_i32_0 = arith.constant 0 : i32
    %c0_i32_1 = arith.constant 0 : i32
    return %c0_i32, %c0_i32_0 : i32, i32
  }
  func.func @transform_3(%arg0: i32) -> (i32, i32) {
    %c0_i32 = arith.constant 0 : i32
    %c0_i32_0 = arith.constant 0 : i32
    %c0_i32_1 = arith.constant 0 : i32
    return %c0_i32, %c0_i32_0 : i32, i32
  }
  func.func @transform_4(%arg0: i32) -> (i32, i32) {
    %c0_i32 = arith.constant 0 : i32
    %c0_i32_0 = arith.constant 0 : i32
    %c0_i32_1 = arith.constant 0 : i32
    return %c0_i32, %c0_i32_0 : i32, i32
  }
  func.func @transform_5(%arg0: i32) -> (i32, i32, i32) {
    %c0_i32 = arith.constant 0 : i32
    %c0_i32_0 = arith.constant 0 : i32
    %c0_i32_1 = arith.constant 0 : i32
    return %arg0, %c0_i32, %c0_i32_0 : i32, i32, i32
  }
}

</mosaic_0001>

<llo_original>
// kernel: tpu_custom_call.1
$region0: #{tpu_custom_call.1}
  #allocation0 [shape = 'u32[]', space=smem, size = 0x4, offset = 0x4, fixed_abs, tag = 'smem constant byte address 0x4 - core index']
  #allocation1 [shape = 'u32[144,128]{1,0:T(1,128)}', space=vmem, size = 0x12000, scoped, tag = 'internal scratch']
  %s0 = inlined_call_operand.hbm [shape: bf16[2,8,8], index: 0, kind: input, shape index: {}]
  %s1 = inlined_call_operand.hbm [shape: bf16[8,32], index: 1, kind: input, shape index: {}]
  %s2 = inlined_call_operand.vmem [shape: f32[1,32], index: 2, kind: input, shape index: {}]
  %s3 = inlined_call_operand.vmem [shape: f32[8,32], index: 3, kind: input, shape index: {}]
  %s4 = inlined_call_operand.vmem [shape: f32[1,32], index: 4, kind: input, shape index: {}]
  %s5 = inlined_call_operand.hbm [shape: f32[2,16,32], index: 5, kind: output, shape index: {}]
  %s6 = sld [smem:[#allocation0]]
  $region38: #{tpu_custom_call.1} parent=0
    _
  %s8 = ssub.s32 1, %s6
  %s9 = scalar_select 0, %s8, %s6
  $region1: #{tpu_custom_call.1} parent=0
    #allocation2 [shape = 'u8[4096]{0}', space=vmem, size = 0x1000, scoped, tag = 'input window, operand 0, single buffered']
    #allocation3 [shape = 's32[1]{0}', space=sflag, size = 0x4, scoped, tag = 'scoped memory for tpu_custom_call.1']
    #allocation4 [shape = 's32[1]{0}', space=sflag, size = 0x4, scoped, tag = 'scoped memory for tpu_custom_call.1']
    #allocation5 [shape = 'u8[2048]{0}', space=vmem, size = 0x800, scoped, tag = 'input window, operand 1, single buffered']
    #allocation6 [shape = 's32[1]{0}', space=sflag, size = 0x4, scoped, tag = 'scoped memory for tpu_custom_call.1']
    #allocation7 [shape = 'u8[16384]{0}', space=vmem, size = 0x4000, scoped, tag = 'output window, operand 0, single buffered']
    %10 = vsyncpa [#allocation3], 0
    %11 = vsyncpa [#allocation6], 0
    %12 = vsyncpa [#allocation4], 0
    // Predicated region
    $region2: #{tpu_custom_call.1} parent=1 // pred_check
      _
    $region3: #{tpu_custom_call.1} parent=1 // pred_check_branch
      %14 = sbr.rel (0) target = $region5
    $region4: #{tpu_custom_call.1} parent=1 // pred_region
      %s16 = ssub.s32 128, 128
      %17 = vsyncadd [#allocation3], %s16
      %s18 = sshll.u32 [#allocation2], 4
      %s19 = int_to_ptr.vmem [resolvable:$true] %s18
      %24 = dma.hbm_to_vmem [thread:$0]  %s0, 128, %s19, [#allocation3], 64, 64, 4
    $region5: #{tpu_custom_call.1} parent=1 // pred_fallthru
      _
    // Predicated region
    $region6: #{tpu_custom_call.1} parent=1 // pred_check
      _
    $region7: #{tpu_custom_call.1} parent=1 // pred_check_branch
      %26 = sbr.rel (0) target = $region9
    $region8: #{tpu_custom_call.1} parent=1 // pred_region
      %s28 = ssub.s32 64, 64
      %29 = vsyncadd [#allocation6], %s28
      %s31 = sshll.u32 [#allocation5], 4
      %s32 = int_to_ptr.vmem [resolvable:$true] %s31
      %34 = dma.hbm_to_vmem [thread:$0]  %s1, 64, %s32, [#allocation6]
    $region9: #{tpu_custom_call.1} parent=1 // pred_fallthru
      _
    // Predicated region
    $region10: #{tpu_custom_call.1} parent=1 // pred_check
      _
    $region11: #{tpu_custom_call.1} parent=1 // pred_check_branch
      %36 = sbr.rel (0) target = $region13
    $region12: #{tpu_custom_call.1} parent=1 // pred_region
      _
    $region13: #{tpu_custom_call.1} parent=1 // pred_fallthru
      _
    // Predicated region
    $region14: #{tpu_custom_call.1} parent=1 // pred_check
      _
    $region15: #{tpu_custom_call.1} parent=1 // pred_check_branch
      %38 = sbr.rel (0) target = $region17
    $region16: #{tpu_custom_call.1} parent=1 // pred_region
      _
    $region17: #{tpu_custom_call.1} parent=1 // pred_fallthru
      _
    // Predicated region
    $region18: #{tpu_custom_call.1} parent=1 // pred_check
      _
    $region19: #{tpu_custom_call.1} parent=1 // pred_check_branch
      %40 = sbr.rel (0) target = $region21
    $region20: #{tpu_custom_call.1} parent=1 // pred_region
      _
    $region21: #{tpu_custom_call.1} parent=1 // pred_fallthru
      _
    // Predicated region
    $region22: #{tpu_custom_call.1} parent=1 // pred_check
      _
    $region23: #{tpu_custom_call.1} parent=1 // pred_check_branch
      %42 = sbr.rel (0) target = $region25
    $region24: #{tpu_custom_call.1} parent=1 // pred_region
      %43 = dma.done [#allocation3], 128
    $region25: #{tpu_custom_call.1} parent=1 // pred_fallthru
      _
    // Predicated region
    $region26: #{tpu_custom_call.1} parent=1 // pred_check
      _
    $region27: #{tpu_custom_call.1} parent=1 // pred_check_branch
      %45 = sbr.rel (0) target = $region29
    $region28: #{tpu_custom_call.1} parent=1 // pred_region
      %46 = dma.done [#allocation6], 64
    $region29: #{tpu_custom_call.1} parent=1 // pred_fallthru
      _
    %v48 = vld [vmem:[#allocation2] sm:$0xf]
    %v49 = vld [vmem:[#allocation2 + $0x4] sm:$0xf]
    %v50 = vld [vmem:[#allocation5] sm:$0xf]
    %v51 = vld [vmem:[%s2] sm:$0x1]
    %v53 = vlaneseq
    %v54 = vshrl.u32 %v53, 7
    %v55 = vsub.s32 0, %v54
    %v56 = vrot.slane %v51, %v55
    %v60 = vunpack.c.l.b16 %v48
    %v61 = vunpack.c.l.b16 %v49
    %v62 = vpack.c.b16 %v61, %v60
    %vm63 = vcmask 64512
    %v65 = vsel %vm63, %v62, 0
    %vm67 = vcmask 1043456
    %v69 = vsel %vm67, %v50, 0
    %71 = vmatprep.subr.bf16.mxu0 0
    %72 = vmatpush1.bf16.msra.mxu0 %v69
    %73 = vmatprep.subr.bf16.mxu0 0
    %74 = vmatpush1.bf16.msra.mxu0 0
    %75 = vmatprep.subr.bf16.mxu0 0
    %76 = vmatpush1.bf16.msra.mxu0 0
    %77 = vmatprep.subr.bf16.mxu0 0
    %78 = vmatpush1.bf16.msra.mxu0 0
    %79 = vmatprep.subr.bf16.mxu0 0
    %80 = vmatpush1.bf16.msra.mxu0 0
    %81 = vmatprep.subr.bf16.mxu0 0
    %82 = vmatpush1.bf16.msra.mxu0 0
    %83 = vmatprep.subr.bf16.mxu0 0
    %84 = vmatpush1.bf16.msra.mxu0 0
    %85 = vmatprep.subr.bf16.mxu0 0
    %86 = vmatpush1.bf16.msra.mxu0 0
    %87 = vmatprep.subr.bf16.mxu0 0
    %88 = vmatpush1.bf16.msra.mxu0 0
    %89 = vmatprep.subr.bf16.mxu0 0
    %90 = vmatpush1.bf16.msra.mxu0 0
    %91 = vmatprep.subr.bf16.mxu0 0
    %92 = vmatpush1.bf16.msra.mxu0 0
    %93 = vmatprep.subr.bf16.mxu0 0
    %94 = vmatpush1.bf16.msra.mxu0 0
    %95 = vmatprep.subr.bf16.mxu0 0
    %96 = vmatpush1.bf16.msra.mxu0 0
    %97 = vmatprep.subr.bf16.mxu0 0
    %98 = vmatpush1.bf16.msra.mxu0 0
    %99 = vmatprep.subr.bf16.mxu0 0
    %100 = vmatpush1.bf16.msra.mxu0 0
    %101 = vmatprep.subr.bf16.mxu0 0
    %102 = vmatpush1.bf16.msra.mxu0 0
    %103 = vmatprep.mubr.bf16.mxu0 0
    %104 = vmatmul.mubr.bf16.gmra.mrb[0].mxu0 %v65
    %v105 = vpop.f32.mrb[0].mxu0
    %v106 = vadd.f32 %v56, %v105
    %v107 = vpop.f32.mrb[0].mxu0
    %v108 = vpop.f32.mrb[0].mxu0
    %v109 = vadd.f32 %v56, %v108
    %v110 = vpop.f32.mrb[0].mxu0
    %111 = vdwg.mxu0
    %v112 = vld [vmem:[%s3] sm:$0xff]
    %v113 = vadd.f32 %v106, %v112
    %v114 = vadd.f32 %v109, %v112
    %v115 = vld [vmem:[%s4] sm:$0x1]
    %v118 = vrot.slane %v113, 7
    %v119 = vrot.slane %v114, 7
    %vm122 = vcmask 1040384
    %v123 = vsel %vm122, %v115, %v118
    %v124 = vsel %vm122, %v115, %v119
    %v125 = vsel %vm122, %v118, 0.0
    %v126 = vsel %vm122, %v119, 0.0
    %vm127 = vcmask 261120
    %128 = vst.msk [vmem:[#allocation7] sm:$0xff] %vm127, %v123
    %129 = vst.msk [vmem:[#allocation7 + $0x8] sm:$0xff] %vm127, %v125
    %130 = vst.msk [vmem:[#allocation7 + $0x10] sm:$0xff] %vm127, %v124
    %131 = vst.msk [vmem:[#allocation7 + $0x18] sm:$0xff] %vm127, %v126
    // Predicated region
    $region30: #{tpu_custom_call.1} parent=1 // pred_check
      _
    $region31: #{tpu_custom_call.1} parent=1 // pred_check_branch
      %133 = sbr.rel (0) target = $region33
    $region32: #{tpu_custom_call.1} parent=1 // pred_region
      %s135 = ssub.s32 512, 512
      %136 = vsyncadd [#allocation4], %s135
      %s137 = sshll.u32 [#allocation7], 4
      %s138 = int_to_ptr.vmem [resolvable:$true] %s137
      %143 = dma.vmem_to_hbm [thread:$0]  %s138, 512, %s5, [#allocation4], 128, 128, 8
    $region33: #{tpu_custom_call.1} parent=1 // pred_fallthru
      _
    // Predicated region
    $region34: #{tpu_custom_call.1} parent=1 // pred_check
      _
    $region35: #{tpu_custom_call.1} parent=1 // pred_check_branch
      %145 = sbr.rel (0) target = $region37
    $region36: #{tpu_custom_call.1} parent=1 // pred_region
      %146 = dma.done [#allocation4], 512
    $region37: #{tpu_custom_call.1} parent=1 // pred_fallthru
      _
    %147 = vsyncpa [#allocation3], 1
    %148 = vsyncpa [#allocation6], 1
    %149 = vsyncpa [#allocation4], 1

</llo_original>
